<compile_context>
chip_gen: v6e
topology: v6e:2x2x1
jax: 0.10.0
libtpu: 0.0.40
codegen_flags: <defaults>
</compile_context>

<pallas_src>
import math

import jax
import jax.numpy as jnp
from jax.experimental import pallas as pl
from jax.experimental.pallas import tpu as pltpu


def _mlp_kernel(x_ref, w1_ref, b1_ref, w2_ref, b2_ref, w3_ref, b3_ref, o_ref):
    # fc1 + ReLU   (TILE_N, F)bf16 @ (F, 64)bf16 -> (TILE_N, 64)f32
    h1 = jnp.dot(x_ref[...], w1_ref[...], preferred_element_type=jnp.float32)
    h1 = jnp.maximum(h1 + b1_ref[...], 0.0)
    # fc2 + ReLU   (TILE_N, 64) @ (64, 32) -> (TILE_N, 32)   (f32, negligible cost)
    h2 = jnp.dot(h1, w2_ref[...], preferred_element_type=jnp.float32)
    h2 = jnp.maximum(h2 + b2_ref[...], 0.0)
    # fc3 + ReLU   (TILE_N, 32) @ (32, 2) -> (TILE_N, 2)
    h3 = jnp.dot(h2, w3_ref[...], preferred_element_type=jnp.float32)
    h3 = jnp.maximum(h3 + b3_ref[...], 0.0)
    o_ref[...] = h3.astype(o_ref.dtype)


def binary_classifier3_forward(x, params, *, tile_n=2048,
                               compute_dtype=jnp.bfloat16):
    """x: (t, b, n, ch) float32.  Returns (n, 2) float32."""
    t, b, n, ch = x.shape
    f = t * b * ch
    # Same semantics as torch .reshape(n, -1) on a contiguous (t, b, n, ch) tensor.
    x2d = x.reshape(n, f)

    w1, b1, w2, b2, w3, b3 = params
    assert x2d.shape[1] == w1.shape[0], (x2d.shape, w1.shape)

    # Halve the bytes of the HBM-bound fc1 streams (kernel accumulates in f32).
    x2d = x2d.astype(compute_dtype)
    w1c = w1.astype(compute_dtype)

    # Row tile: multiple of 8 (sublane rule); don't exceed what N needs.
    tile_n = max(8, min(tile_n, ((n + 7) // 8) * 8))
    n_pad = ((n + tile_n - 1) // tile_n) * tile_n
    if n_pad != n:
        x2d = jnp.pad(x2d, ((0, n_pad - n), (0, 0)))
    grid = (n_pad // tile_n,)

    flops = 2 * n_pad * (f * 64 + 64 * 32 + 32 * 2)
    bytes_accessed = (
        n_pad * f * x2d.dtype.itemsize
        + w1c.size * w1c.dtype.itemsize
        + sum(p.size * p.dtype.itemsize for p in (b1, w2, b2, w3, b3))
        + n_pad * 2 * 4
    )

    out = pl.pallas_call(
        _mlp_kernel,
        out_shape=jax.ShapeDtypeStruct((n_pad, 2), jnp.float32),
        grid=grid,
        in_specs=[
            pl.BlockSpec((tile_n, f), lambda i: (i, 0)),   # x: streamed row tiles
            pl.BlockSpec(w1c.shape, lambda i: (0, 0)),     # weights/biases: resident
            pl.BlockSpec(b1.shape, lambda i: (0, 0)),
            pl.BlockSpec(w2.shape, lambda i: (0, 0)),
            pl.BlockSpec(b2.shape, lambda i: (0, 0)),
            pl.BlockSpec(w3.shape, lambda i: (0, 0)),
            pl.BlockSpec(b3.shape, lambda i: (0, 0)),
        ],
        out_specs=pl.BlockSpec((tile_n, 2), lambda i: (i, 0)),
        compiler_params=pltpu.CompilerParams(
            dimension_semantics=("parallel",),          # megacore split on v7x
            vmem_limit_bytes=32 * 1024 * 1024,
        ),
        cost_estimate=pl.CostEstimate(
            flops=flops, transcendentals=0, bytes_accessed=bytes_accessed
        ),
    )(x2d, w1c, b1, w2, b2, w3, b3)

    return out[:n]


def init_params(key, input_dim):
    """PyTorch nn.Linear-style init, weights stored transposed as (in, out),
    biases as (1, out) so they stay >= 2-D inside the kernel."""
    in1 = input_dim * 12 * 64
    dims = [(in1, 64), (64, 32), (32, 2)]
    params = []
    for fan_in, fan_out in dims:
        kw, kb, key = jax.random.split(key, 3)
        bound = 1.0 / math.sqrt(fan_in)
        w = jax.random.uniform(kw, (fan_in, fan_out), jnp.float32, -bound, bound)
        b = jax.random.uniform(kb, (1, fan_out), jnp.float32, -bound, bound)
        params += [w, b]
    return tuple(params)


def _reference_forward(x, params, *, fc1_dtype=jnp.float32):
    """Plain-JAX reference.  fc1_dtype=bf16 mimics the kernel's operand cast."""
    t, b, n, ch = x.shape
    h = x.reshape(n, -1)
    w1, b1, w2, b2, w3, b3 = params
    h = jnp.dot(h.astype(fc1_dtype), w1.astype(fc1_dtype),
                preferred_element_type=jnp.float32)
    h = jnp.maximum(h + b1, 0.0)
    h = jnp.maximum(h @ w2 + b2, 0.0)
    h = jnp.maximum(h @ w3 + b3, 0.0)
    return h


if __name__ == "__main__":
    # input_dim = 1  =>  fc1 expects 1 * 12 * 64 = 768 flattened features per
    # row, so t*b*ch must equal 768.  x: (t=12, b=1, n=8, ch=64) -> (8, 768).
    # NOTE: at this demo scale the kernel is pure launch overhead; the tiling /
    # bf16 choices above only pay off for N in the thousands.
    input_dim = 1
    t, b, n, ch = 12, 1, 8, 64

    key = jax.random.PRNGKey(0)
    kx, kp = jax.random.split(key)
    x = jax.random.normal(kx, (t, b, n, ch), dtype=jnp.float32)
    params = init_params(kp, input_dim)

    out = binary_classifier3_forward(x, params)
    out = jax.block_until_ready(out)
    assert out.shape == (n, 2), out.shape

    # Tight check vs. a reference with the same bf16 fc1 operands.
    ref_bf16 = _reference_forward(x, params, fc1_dtype=jnp.bfloat16)
    assert jnp.allclose(out, ref_bf16, atol=2e-3, rtol=2e-3), "mismatch vs bf16 ref"

    # Looser semantic check vs. the full-f32 module forward.
    ref_f32 = _reference_forward(x, params, fc1_dtype=jnp.float32)
    assert jnp.allclose(out, ref_f32, atol=5e-2, rtol=5e-2), "mismatch vs f32 ref"

    print("KERNEL_OK")
</pallas_src>

<mosaic_0001>
module attributes {stable_mosaic.version = 11 : i64} {
  func.func @_mlp_kernel(%arg0: i32, %arg1: memref<8x768xbf16, #tpu.memory_space<vmem>>, %arg2: memref<768x64xbf16, #tpu.memory_space<vmem>>, %arg3: memref<1x64xf32, #tpu.memory_space<vmem>>, %arg4: memref<64x32xf32, #tpu.memory_space<vmem>>, %arg5: memref<1x32xf32, #tpu.memory_space<vmem>>, %arg6: memref<32x2xf32, #tpu.memory_space<vmem>>, %arg7: memref<1x2xf32, #tpu.memory_space<vmem>>, %arg8: memref<8x2xf32, #tpu.memory_space<vmem>>) attributes {dimension_semantics = [#tpu.dimension_semantics<parallel>], iteration_bounds = array<i64: 1>, scalar_prefetch = 0 : i64, scratch_operands = 0 : i64, tpu.core_type = #tpu.core_type<tc>, window_params = [{transform_indices = @transform_0, window_bounds = array<i64: 8, 768>}, {pipeline_mode = #tpu.pipeline_mode<synchronous>, transform_indices = @transform_1, window_bounds = array<i64: 768, 64>}, {pipeline_mode = #tpu.pipeline_mode<synchronous>, transform_indices = @transform_2, window_bounds = array<i64: 1, 64>}, {pipeline_mode = #tpu.pipeline_mode<synchronous>, transform_indices = @transform_3, window_bounds = array<i64: 64, 32>}, {pipeline_mode = #tpu.pipeline_mode<synchronous>, transform_indices = @transform_4, window_bounds = array<i64: 1, 32>}, {pipeline_mode = #tpu.pipeline_mode<synchronous>, transform_indices = @transform_5, window_bounds = array<i64: 32, 2>}, {pipeline_mode = #tpu.pipeline_mode<synchronous>, transform_indices = @transform_6, window_bounds = array<i64: 1, 2>}, {transform_indices = @transform_7, window_bounds = array<i64: 8, 2>}]} {
    %c0 = arith.constant 0 : index
    %c0_0 = arith.constant 0 : index
    %0 = vector.load %arg1[%c0, %c0_0] : memref<8x768xbf16, #tpu.memory_space<vmem>>, vector<8x768xbf16>
    %c0_1 = arith.constant 0 : index
    %c0_2 = arith.constant 0 : index
    %1 = vector.load %arg2[%c0_1, %c0_2] : memref<768x64xbf16, #tpu.memory_space<vmem>>, vector<768x64xbf16>
    %cst = arith.constant dense<0.000000e+00> : vector<8x64xf32>
    %2 = tpu.matmul %0, %1, %cst {dimension_numbers = #tpu.dot_dimension_numbers<[1], [0], [0], [1], [0, 0, 1, 1], [], []>} : vector<8x768xbf16>, vector<768x64xbf16>, vector<8x64xf32> -> vector<8x64xf32>
    %c0_3 = arith.constant 0 : index
    %c0_4 = arith.constant 0 : index
    %3 = vector.load %arg3[%c0_3, %c0_4] : memref<1x64xf32, #tpu.memory_space<vmem>>, vector<1x64xf32>
    %4 = vector.broadcast %3 : vector<1x64xf32> to vector<8x64xf32>
    %5 = arith.addf %2, %4 : vector<8x64xf32>
    %cst_5 = arith.constant 0.000000e+00 : f32
    %6 = vector.broadcast %cst_5 : f32 to vector<8x64xf32>
    %7 = arith.maximumf %5, %6 : vector<8x64xf32>
    %c0_6 = arith.constant 0 : index
    %c0_7 = arith.constant 0 : index
    %8 = vector.load %arg4[%c0_6, %c0_7] : memref<64x32xf32, #tpu.memory_space<vmem>>, vector<64x32xf32>
    %cst_8 = arith.constant dense<0.000000e+00> : vector<8x32xf32>
    %9 = tpu.matmul %7, %8, %cst_8 {dimension_numbers = #tpu.dot_dimension_numbers<[1], [0], [0], [1], [0, 0, 1, 1], [], []>} : vector<8x64xf32>, vector<64x32xf32>, vector<8x32xf32> -> vector<8x32xf32>
    %c0_9 = arith.constant 0 : index
    %c0_10 = arith.constant 0 : index
    %10 = vector.load %arg5[%c0_9, %c0_10] : memref<1x32xf32, #tpu.memory_space<vmem>>, vector<1x32xf32>
    %11 = vector.broadcast %10 : vector<1x32xf32> to vector<8x32xf32>
    %12 = arith.addf %9, %11 : vector<8x32xf32>
    %cst_11 = arith.constant 0.000000e+00 : f32
    %13 = vector.broadcast %cst_11 : f32 to vector<8x32xf32>
    %14 = arith.maximumf %12, %13 : vector<8x32xf32>
    %c0_12 = arith.constant 0 : index
    %c0_13 = arith.constant 0 : index
    %15 = vector.load %arg6[%c0_12, %c0_13] : memref<32x2xf32, #tpu.memory_space<vmem>>, vector<32x2xf32>
    %cst_14 = arith.constant dense<0.000000e+00> : vector<8x2xf32>
    %16 = tpu.matmul %14, %15, %cst_14 {dimension_numbers = #tpu.dot_dimension_numbers<[1], [0], [0], [1], [0, 0, 1, 1], [], []>} : vector<8x32xf32>, vector<32x2xf32>, vector<8x2xf32> -> vector<8x2xf32>
    %c0_15 = arith.constant 0 : index
    %c0_16 = arith.constant 0 : index
    %17 = vector.load %arg7[%c0_15, %c0_16] : memref<1x2xf32, #tpu.memory_space<vmem>>, vector<1x2xf32>
    %18 = vector.broadcast %17 : vector<1x2xf32> to vector<8x2xf32>
    %19 = arith.addf %16, %18 : vector<8x2xf32>
    %cst_17 = arith.constant 0.000000e+00 : f32
    %20 = vector.broadcast %cst_17 : f32 to vector<8x2xf32>
    %21 = arith.maximumf %19, %20 : vector<8x2xf32>
    %c0_18 = arith.constant 0 : index
    %c0_19 = arith.constant 0 : index
    %22 = vector.load %arg8[%c0_18, %c0_19] : memref<8x2xf32, #tpu.memory_space<vmem>>, vector<8x2xf32>
    tpu.vector_store %arg8[%c0_18, %c0_19], %21 {strides = array<i32>} : memref<8x2xf32, #tpu.memory_space<vmem>>, vector<8x2xf32>,
    return
  }
  func.func @transform_0(%arg0: i32) -> (i32, i32) {
    %c0_i32 = arith.constant 0 : i32
    %c0_i32_0 = arith.constant 0 : i32
    return %arg0, %c0_i32 : i32, i32
  }
  func.func @transform_1(%arg0: i32) -> (i32, i32) {
    %c0_i32 = arith.constant 0 : i32
    %c0_i32_0 = arith.constant 0 : i32
    %c0_i32_1 = arith.constant 0 : i32
    return %c0_i32, %c0_i32_0 : i32, i32
  }
  func.func @transform_2(%arg0: i32) -> (i32, i32) {
    %c0_i32 = arith.constant 0 : i32
    %c0_i32_0 = arith.constant 0 : i32
    %c0_i32_1 = arith.constant 0 : i32
    return %c0_i32, %c0_i32_0 : i32, i32
  }
  func.func @transform_3(%arg0: i32) -> (i32, i32) {
    %c0_i32 = arith.constant 0 : i32
    %c0_i32_0 = arith.constant 0 : i32
    %c0_i32_1 = arith.constant 0 : i32
    return %c0_i32, %c0_i32_0 : i32, i32
  }
  func.func @transform_4(%arg0: i32) -> (i32, i32) {
    %c0_i32 = arith.constant 0 : i32
    %c0_i32_0 = arith.constant 0 : i32
    %c0_i32_1 = arith.constant 0 : i32
    return %c0_i32, %c0_i32_0 : i32, i32
  }
  func.func @transform_5(%arg0: i32) -> (i32, i32) {
    %c0_i32 = arith.constant 0 : i32
    %c0_i32_0 = arith.constant 0 : i32
    %c0_i32_1 = arith.constant 0 : i32
    return %c0_i32, %c0_i32_0 : i32, i32
  }
  func.func @transform_6(%arg0: i32) -> (i32, i32) {
    %c0_i32 = arith.constant 0 : i32
    %c0_i32_0 = arith.constant 0 : i32
    %c0_i32_1 = arith.constant 0 : i32
    return %c0_i32, %c0_i32_0 : i32, i32
  }
  func.func @transform_7(%arg0: i32) -> (i32, i32) {
    %c0_i32 = arith.constant 0 : i32
    %c0_i32_0 = arith.constant 0 : i32
    return %arg0, %c0_i32 : i32, i32
  }
}

</mosaic_0001>

<llo_original>
// kernel: tpu_custom_call.1
$region0: #{tpu_custom_call.1}
  #allocation0 [shape = 'u32[]', space=smem, size = 0x4, offset = 0x4, fixed_abs, tag = 'smem constant byte address 0x4 - core index']
  #allocation1 [shape = 'u32[144,128]{1,0:T(1,128)}', space=vmem, size = 0x12000, scoped, tag = 'internal scratch']
  %s0 = inlined_call_operand.vmem [shape: bf16[8,768], index: 0, kind: input, shape index: {}]
  %s1 = inlined_call_operand.vmem [shape: bf16[768,64], index: 1, kind: input, shape index: {}]
  %s2 = inlined_call_operand.vmem [shape: f32[1,64], index: 2, kind: input, shape index: {}]
  %s3 = inlined_call_operand.vmem [shape: f32[64,32], index: 3, kind: input, shape index: {}]
  %s4 = inlined_call_operand.vmem [shape: f32[1,32], index: 4, kind: input, shape index: {}]
  %s5 = inlined_call_operand.vmem [shape: f32[32,2], index: 5, kind: input, shape index: {}]
  %s6 = inlined_call_operand.vmem [shape: f32[1,2], index: 6, kind: input, shape index: {}]
  %s7 = inlined_call_operand.vmem [shape: f32[8,2], index: 7, kind: output, shape index: {}]
  %s8 = sld [smem:[#allocation0]]
  $region38: #{tpu_custom_call.1} parent=0
    _
  %s10 = ssub.s32 1, %s8
  %s11 = scalar_select 0, %s10, %s8
  // Predicated region
  $region2: #{tpu_custom_call.1} parent=0 // pred_check
    _
  $region3: #{tpu_custom_call.1} parent=0 // pred_check_branch
    %13 = sbr.rel (0) target = $region5
  $region4: #{tpu_custom_call.1} parent=0 // pred_region
    _
  $region5: #{tpu_custom_call.1} parent=0 // pred_fallthru
    _
  // Predicated region
  $region6: #{tpu_custom_call.1} parent=0 // pred_check
    _
  $region7: #{tpu_custom_call.1} parent=0 // pred_check_branch
    %15 = sbr.rel (0) target = $region9
  $region8: #{tpu_custom_call.1} parent=0 // pred_region
    _
  $region9: #{tpu_custom_call.1} parent=0 // pred_fallthru
    _
  // Predicated region
  $region10: #{tpu_custom_call.1} parent=0 // pred_check
    _
  $region11: #{tpu_custom_call.1} parent=0 // pred_check_branch
    %17 = sbr.rel (0) target = $region13
  $region12: #{tpu_custom_call.1} parent=0 // pred_region
    _
  $region13: #{tpu_custom_call.1} parent=0 // pred_fallthru
    _
  // Predicated region
  $region14: #{tpu_custom_call.1} parent=0 // pred_check
    _
  $region15: #{tpu_custom_call.1} parent=0 // pred_check_branch
    %19 = sbr.rel (0) target = $region17
  $region16: #{tpu_custom_call.1} parent=0 // pred_region
    _
  $region17: #{tpu_custom_call.1} parent=0 // pred_fallthru
    _
  // Predicated region
  $region18: #{tpu_custom_call.1} parent=0 // pred_check
    _
  $region19: #{tpu_custom_call.1} parent=0 // pred_check_branch
    %21 = sbr.rel (0) target = $region21
  $region20: #{tpu_custom_call.1} parent=0 // pred_region
    _
  $region21: #{tpu_custom_call.1} parent=0 // pred_fallthru
    _
  // Predicated region
  $region22: #{tpu_custom_call.1} parent=0 // pred_check
    _
  $region23: #{tpu_custom_call.1} parent=0 // pred_check_branch
    %23 = sbr.rel (0) target = $region25
  $region24: #{tpu_custom_call.1} parent=0 // pred_region
    _
  $region25: #{tpu_custom_call.1} parent=0 // pred_fallthru
    _
  // Predicated region
  $region26: #{tpu_custom_call.1} parent=0 // pred_check
    _
  $region27: #{tpu_custom_call.1} parent=0 // pred_check_branch
    %25 = sbr.rel (0) target = $region29
  $region28: #{tpu_custom_call.1} parent=0 // pred_region
    _
  $region29: #{tpu_custom_call.1} parent=0 // pred_fallthru
    _
  %v27 = vld [vmem:[%s0] sm:$0xff]
  %v28 = vld [vmem:[%s0 + $0x8] sm:$0xff]
  %v29 = vld [vmem:[%s0 + $0x10] sm:$0xff]
  %v30 = vld [vmem:[%s1] sm:$0xf]
  %v31 = vld [vmem:[%s1 + $0x4] sm:$0xf]
  %v32 = vld [vmem:[%s1 + $0x8] sm:$0xf]
  %v33 = vld [vmem:[%s1 + $0xc] sm:$0xf]
  %v34 = vld [vmem:[%s1 + $0x10] sm:$0xf]
  %v35 = vld [vmem:[%s1 + $0x14] sm:$0xf]
  %v36 = vld [vmem:[%s1 + $0x18] sm:$0xf]
  %v37 = vld [vmem:[%s1 + $0x1c] sm:$0xf]
  %v38 = vld [vmem:[%s1 + $0x20] sm:$0xf]
  %v39 = vld [vmem:[%s1 + $0x24] sm:$0xf]
  %v40 = vld [vmem:[%s1 + $0x28] sm:$0xf]
  %v41 = vld [vmem:[%s1 + $0x2c] sm:$0xf]
  %v42 = vld [vmem:[%s1 + $0x30] sm:$0xf]
  %v43 = vld [vmem:[%s1 + $0x34] sm:$0xf]
  %v44 = vld [vmem:[%s1 + $0x38] sm:$0xf]
  %v45 = vld [vmem:[%s1 + $0x3c] sm:$0xf]
  %v46 = vld [vmem:[%s1 + $0x40] sm:$0xf]
  %v47 = vld [vmem:[%s1 + $0x44] sm:$0xf]
  %v48 = vld [vmem:[%s1 + $0x48] sm:$0xf]
  %v49 = vld [vmem:[%s1 + $0x4c] sm:$0xf]
  %v50 = vld [vmem:[%s1 + $0x50] sm:$0xf]
  %v51 = vld [vmem:[%s1 + $0x54] sm:$0xf]
  %v52 = vld [vmem:[%s1 + $0x58] sm:$0xf]
  %v53 = vld [vmem:[%s1 + $0x5c] sm:$0xf]
  %v54 = vld [vmem:[%s1 + $0x60] sm:$0xf]
  %v55 = vld [vmem:[%s1 + $0x64] sm:$0xf]
  %v56 = vld [vmem:[%s1 + $0x68] sm:$0xf]
  %v57 = vld [vmem:[%s1 + $0x6c] sm:$0xf]
  %v58 = vld [vmem:[%s1 + $0x70] sm:$0xf]
  %v59 = vld [vmem:[%s1 + $0x74] sm:$0xf]
  %v60 = vld [vmem:[%s1 + $0x78] sm:$0xf]
  %v61 = vld [vmem:[%s1 + $0x7c] sm:$0xf]
  %v62 = vld [vmem:[%s1 + $0x80] sm:$0xf]
  %v63 = vld [vmem:[%s1 + $0x84] sm:$0xf]
  %v64 = vld [vmem:[%s1 + $0x88] sm:$0xf]
  %v65 = vld [vmem:[%s1 + $0x8c] sm:$0xf]
  %v66 = vld [vmem:[%s1 + $0x90] sm:$0xf]
  %v67 = vld [vmem:[%s1 + $0x94] sm:$0xf]
  %v68 = vld [vmem:[%s1 + $0x98] sm:$0xf]
  %v69 = vld [vmem:[%s1 + $0x9c] sm:$0xf]
  %v70 = vld [vmem:[%s1 + $0xa0] sm:$0xf]
  %v71 = vld [vmem:[%s1 + $0xa4] sm:$0xf]
  %v72 = vld [vmem:[%s1 + $0xa8] sm:$0xf]
  %v73 = vld [vmem:[%s1 + $0xac] sm:$0xf]
  %v74 = vld [vmem:[%s1 + $0xb0] sm:$0xf]
  %v75 = vld [vmem:[%s1 + $0xb4] sm:$0xf]
  %v76 = vld [vmem:[%s1 + $0xb8] sm:$0xf]
  %v77 = vld [vmem:[%s1 + $0xbc] sm:$0xf]
  %v78 = vld [vmem:[%s1 + $0xc0] sm:$0xf]
  %v79 = vld [vmem:[%s1 + $0xc4] sm:$0xf]
  %v80 = vld [vmem:[%s1 + $0xc8] sm:$0xf]
  %v81 = vld [vmem:[%s1 + $0xcc] sm:$0xf]
  %v82 = vld [vmem:[%s1 + $0xd0] sm:$0xf]
  %v83 = vld [vmem:[%s1 + $0xd4] sm:$0xf]
  %v84 = vld [vmem:[%s1 + $0xd8] sm:$0xf]
  %v85 = vld [vmem:[%s1 + $0xdc] sm:$0xf]
  %v86 = vld [vmem:[%s1 + $0xe0] sm:$0xf]
  %v87 = vld [vmem:[%s1 + $0xe4] sm:$0xf]
  %v88 = vld [vmem:[%s1 + $0xe8] sm:$0xf]
  %v89 = vld [vmem:[%s1 + $0xec] sm:$0xf]
  %v90 = vld [vmem:[%s1 + $0xf0] sm:$0xf]
  %v91 = vld [vmem:[%s1 + $0xf4] sm:$0xf]
  %v92 = vld [vmem:[%s1 + $0xf8] sm:$0xf]
  %v93 = vld [vmem:[%s1 + $0xfc] sm:$0xf]
  %v94 = vld [vmem:[%s1 + $0x100] sm:$0xf]
  %v95 = vld [vmem:[%s1 + $0x104] sm:$0xf]
  %v96 = vld [vmem:[%s1 + $0x108] sm:$0xf]
  %v97 = vld [vmem:[%s1 + $0x10c] sm:$0xf]
  %v98 = vld [vmem:[%s1 + $0x110] sm:$0xf]
  %v99 = vld [vmem:[%s1 + $0x114] sm:$0xf]
  %v100 = vld [vmem:[%s1 + $0x118] sm:$0xf]
  %v101 = vld [vmem:[%s1 + $0x11c] sm:$0xf]
  %v102 = vld [vmem:[%s1 + $0x120] sm:$0xf]
  %v103 = vld [vmem:[%s1 + $0x124] sm:$0xf]
  %v104 = vld [vmem:[%s1 + $0x128] sm:$0xf]
  %v105 = vld [vmem:[%s1 + $0x12c] sm:$0xf]
  %v106 = vld [vmem:[%s1 + $0x130] sm:$0xf]
  %v107 = vld [vmem:[%s1 + $0x134] sm:$0xf]
  %v108 = vld [vmem:[%s1 + $0x138] sm:$0xf]
  %v109 = vld [vmem:[%s1 + $0x13c] sm:$0xf]
  %v110 = vld [vmem:[%s1 + $0x140] sm:$0xf]
  %v111 = vld [vmem:[%s1 + $0x144] sm:$0xf]
  %v112 = vld [vmem:[%s1 + $0x148] sm:$0xf]
  %v113 = vld [vmem:[%s1 + $0x14c] sm:$0xf]
  %v114 = vld [vmem:[%s1 + $0x150] sm:$0xf]
  %v115 = vld [vmem:[%s1 + $0x154] sm:$0xf]
  %v116 = vld [vmem:[%s1 + $0x158] sm:$0xf]
  %v117 = vld [vmem:[%s1 + $0x15c] sm:$0xf]
  %v118 = vld [vmem:[%s1 + $0x160] sm:$0xf]
  %v119 = vld [vmem:[%s1 + $0x164] sm:$0xf]
  %v120 = vld [vmem:[%s1 + $0x168] sm:$0xf]
  %v121 = vld [vmem:[%s1 + $0x16c] sm:$0xf]
  %v122 = vld [vmem:[%s1 + $0x170] sm:$0xf]
  %v123 = vld [vmem:[%s1 + $0x174] sm:$0xf]
  %v124 = vld [vmem:[%s1 + $0x178] sm:$0xf]
  %v125 = vld [vmem:[%s1 + $0x17c] sm:$0xf]
  %v126 = vld [vmem:[%s2] sm:$0x1]
  %v128 = vlaneseq
  %v129 = vshrl.u32 %v128, 7
  %v130 = vsub.s32 0, %v129
  %v131 = vrot.slane %v126, %v130
  %v136 = vunpack.c.l.b16 %v27
  %v137 = vunpack.c.h.b16 %v27
  %v138 = vunpack.c.l.b16 %v28
  %v139 = vunpack.c.h.b16 %v28
  %v140 = vunpack.c.l.b16 %v29
  %v141 = vunpack.c.h.b16 %v29
  %v142 = vpack.c.b16 %v136, %v136
  %v143 = vpack.c.b16 %v137, %v137
  %v144 = vpack.c.b16 %v138, %v138
  %v145 = vpack.c.b16 %v139, %v139
  %v146 = vpack.c.b16 %v140, %v140
  %v147 = vpack.c.b16 %v141, %v141
  %v250 = vunpack.c.l.b16 %v30
  %v251 = vunpack.c.l.b16 %v31
  %v252 = vunpack.c.l.b16 %v32
  %v253 = vunpack.c.l.b16 %v33
  %v254 = vunpack.c.l.b16 %v34
  %v255 = vunpack.c.l.b16 %v35
  %v256 = vunpack.c.l.b16 %v36
  %v257 = vunpack.c.l.b16 %v37
  %v258 = vunpack.c.l.b16 %v38
  %v259 = vunpack.c.l.b16 %v39
  %v260 = vunpack.c.l.b16 %v40
  %v261 = vunpack.c.l.b16 %v41
  %v262 = vunpack.c.l.b16 %v42
  %v263 = vunpack.c.l.b16 %v43
  %v264 = vunpack.c.l.b16 %v44
  %v265 = vunpack.c.l.b16 %v45
  %v266 = vunpack.c.l.b16 %v46
  %v267 = vunpack.c.l.b16 %v47
  %v268 = vunpack.c.l.b16 %v48
  %v269 = vunpack.c.l.b16 %v49
  %v270 = vunpack.c.l.b16 %v50
  %v271 = vunpack.c.l.b16 %v51
  %v272 = vunpack.c.l.b16 %v52
  %v273 = vunpack.c.l.b16 %v53
  %v274 = vunpack.c.l.b16 %v54
  %v275 = vunpack.c.l.b16 %v55
  %v276 = vunpack.c.l.b16 %v56
  %v277 = vunpack.c.l.b16 %v57
  %v278 = vunpack.c.l.b16 %v58
  %v279 = vunpack.c.l.b16 %v59
  %v280 = vunpack.c.l.b16 %v60
  %v281 = vunpack.c.l.b16 %v61
  %v282 = vunpack.c.l.b16 %v62
  %v283 = vunpack.c.l.b16 %v63
  %v284 = vunpack.c.l.b16 %v64
  %v285 = vunpack.c.l.b16 %v65
  %v286 = vunpack.c.l.b16 %v66
  %v287 = vunpack.c.l.b16 %v67
  %v288 = vunpack.c.l.b16 %v68
  %v289 = vunpack.c.l.b16 %v69
  %v290 = vunpack.c.l.b16 %v70
  %v291 = vunpack.c.l.b16 %v71
  %v292 = vunpack.c.l.b16 %v72
  %v293 = vunpack.c.l.b16 %v73
  %v294 = vunpack.c.l.b16 %v74
  %v295 = vunpack.c.l.b16 %v75
  %v296 = vunpack.c.l.b16 %v76
  %v297 = vunpack.c.l.b16 %v77
  %v298 = vunpack.c.l.b16 %v78
  %v299 = vunpack.c.l.b16 %v79
  %v300 = vunpack.c.l.b16 %v80
  %v301 = vunpack.c.l.b16 %v81
  %v302 = vunpack.c.l.b16 %v82
  %v303 = vunpack.c.l.b16 %v83
  %v304 = vunpack.c.l.b16 %v84
  %v305 = vunpack.c.l.b16 %v85
  %v306 = vunpack.c.l.b16 %v86
  %v307 = vunpack.c.l.b16 %v87
  %v308 = vunpack.c.l.b16 %v88
  %v309 = vunpack.c.l.b16 %v89
  %v310 = vunpack.c.l.b16 %v90
  %v311 = vunpack.c.l.b16 %v91
  %v312 = vunpack.c.l.b16 %v92
  %v313 = vunpack.c.l.b16 %v93
  %v314 = vunpack.c.l.b16 %v94
  %v315 = vunpack.c.l.b16 %v95
  %v316 = vunpack.c.l.b16 %v96
  %v317 = vunpack.c.l.b16 %v97
  %v318 = vunpack.c.l.b16 %v98
  %v319 = vunpack.c.l.b16 %v99
  %v320 = vunpack.c.l.b16 %v100
  %v321 = vunpack.c.l.b16 %v101
  %v322 = vunpack.c.l.b16 %v102
  %v323 = vunpack.c.l.b16 %v103
  %v324 = vunpack.c.l.b16 %v104
  %v325 = vunpack.c.l.b16 %v105
  %v326 = vunpack.c.l.b16 %v106
  %v327 = vunpack.c.l.b16 %v107
  %v328 = vunpack.c.l.b16 %v108
  %v329 = vunpack.c.l.b16 %v109
  %v330 = vunpack.c.l.b16 %v110
  %v331 = vunpack.c.l.b16 %v111
  %v332 = vunpack.c.l.b16 %v112
  %v333 = vunpack.c.l.b16 %v113
  %v334 = vunpack.c.l.b16 %v114
  %v335 = vunpack.c.l.b16 %v115
  %v336 = vunpack.c.l.b16 %v116
  %v337 = vunpack.c.l.b16 %v117
  %v338 = vunpack.c.l.b16 %v118
  %v339 = vunpack.c.l.b16 %v119
  %v340 = vunpack.c.l.b16 %v120
  %v341 = vunpack.c.l.b16 %v121
  %v342 = vunpack.c.l.b16 %v122
  %v343 = vunpack.c.l.b16 %v123
  %v344 = vunpack.c.l.b16 %v124
  %v345 = vunpack.c.l.b16 %v125
  %v346 = vpack.c.b16 %v251, %v250
  %v347 = vpack.c.b16 %v253, %v252
  %v348 = vpack.c.b16 %v255, %v254
  %v349 = vpack.c.b16 %v257, %v256
  %v350 = vpack.c.b16 %v259, %v258
  %v351 = vpack.c.b16 %v261, %v260
  %v352 = vpack.c.b16 %v263, %v262
  %v353 = vpack.c.b16 %v265, %v264
  %v354 = vpack.c.b16 %v267, %v266
  %v355 = vpack.c.b16 %v269, %v268
  %v356 = vpack.c.b16 %v271, %v270
  %v357 = vpack.c.b16 %v273, %v272
  %v358 = vpack.c.b16 %v275, %v274
  %v359 = vpack.c.b16 %v277, %v276
  %v360 = vpack.c.b16 %v279, %v278
  %v361 = vpack.c.b16 %v281, %v280
  %v362 = vpack.c.b16 %v283, %v282
  %v363 = vpack.c.b16 %v285, %v284
  %v364 = vpack.c.b16 %v287, %v286
  %v365 = vpack.c.b16 %v289, %v288
  %v366 = vpack.c.b16 %v291, %v290
  %v367 = vpack.c.b16 %v293, %v292
  %v368 = vpack.c.b16 %v295, %v294
  %v369 = vpack.c.b16 %v297, %v296
  %v370 = vpack.c.b16 %v299, %v298
  %v371 = vpack.c.b16 %v301, %v300
  %v372 = vpack.c.b16 %v303, %v302
  %v373 = vpack.c.b16 %v305, %v304
  %v374 = vpack.c.b16 %v307, %v306
  %v375 = vpack.c.b16 %v309, %v308
  %v376 = vpack.c.b16 %v311, %v310
  %v377 = vpack.c.b16 %v313, %v312
  %v378 = vpack.c.b16 %v315, %v314
  %v379 = vpack.c.b16 %v317, %v316
  %v380 = vpack.c.b16 %v319, %v318
  %v381 = vpack.c.b16 %v321, %v320
  %v382 = vpack.c.b16 %v323, %v322
  %v383 = vpack.c.b16 %v325, %v324
  %v384 = vpack.c.b16 %v327, %v326
  %v385 = vpack.c.b16 %v329, %v328
  %v386 = vpack.c.b16 %v331, %v330
  %v387 = vpack.c.b16 %v333, %v332
  %v388 = vpack.c.b16 %v335, %v334
  %v389 = vpack.c.b16 %v337, %v336
  %v390 = vpack.c.b16 %v339, %v338
  %v391 = vpack.c.b16 %v341, %v340
  %v392 = vpack.c.b16 %v343, %v342
  %v393 = vpack.c.b16 %v345, %v344
  %442 = vmatprep.subr.bf16.mxu0 0
  %443 = vmatpush1.bf16.msra.mxu0 %v353
  %444 = vmatprep.subr.bf16.mxu0 0
  %445 = vmatpush1.bf16.msra.mxu0 %v352
  %446 = vmatprep.subr.bf16.mxu0 0
  %447 = vmatpush1.bf16.msra.mxu0 %v351
  %448 = vmatprep.subr.bf16.mxu0 0
  %449 = vmatpush1.bf16.msra.mxu0 %v350
  %450 = vmatprep.subr.bf16.mxu0 0
  %451 = vmatpush1.bf16.msra.mxu0 %v349
  %452 = vmatprep.subr.bf16.mxu0 0
  %453 = vmatpush1.bf16.msra.mxu0 %v348
  %454 = vmatprep.subr.bf16.mxu0 0
  %455 = vmatpush1.bf16.msra.mxu0 %v347
  %456 = vmatprep.subr.bf16.mxu0 0
  %457 = vmatpush1.bf16.msra.mxu0 %v346
  %458 = vmatprep.subr.bf16.mxu0 0
  %459 = vmatpush2.bf16.msra.mxu0 %v361
  %460 = vmatprep.subr.bf16.mxu0 0
  %461 = vmatpush2.bf16.msra.mxu0 %v360
  %462 = vmatprep.subr.bf16.mxu0 0
  %463 = vmatpush2.bf16.msra.mxu0 %v359
  %464 = vmatprep.subr.bf16.mxu0 0
  %465 = vmatpush2.bf16.msra.mxu0 %v358
  %466 = vmatprep.subr.bf16.mxu0 0
  %467 = vmatpush2.bf16.msra.mxu0 %v357
  %468 = vmatprep.subr.bf16.mxu0 0
  %469 = vmatpush2.bf16.msra.mxu0 %v356
  %470 = vmatprep.subr.bf16.mxu0 0
  %471 = vmatpush2.bf16.msra.mxu0 %v355
  %472 = vmatprep.subr.bf16.mxu0 0
  %473 = vmatpush2.bf16.msra.mxu0 %v354
  %474 = vmatprep.mubr.bf16.mxu0 %v143
  %475 = vmatmul.mubr.bf16.gmra.mxu0 %v142
  %v476 = vpop.f32.mrf.mxu0
  %v477 = vadd.f32 %v131, %v476
  %v478 = vpop.f32.mrf.mxu0
  %v479 = vpop.f32.mrf.mxu0
  %v480 = vpop.f32.mrf.mxu0
  %481 = vdwg.mxu0
  %482 = vmatprep.subr.bf16.mxu0 0
  %483 = vmatpush1.bf16.msra.mxu0 %v369
  %484 = vmatprep.subr.bf16.mxu0 0
  %485 = vmatpush1.bf16.msra.mxu0 %v368
  %486 = vmatprep.subr.bf16.mxu0 0
  %487 = vmatpush1.bf16.msra.mxu0 %v367
  %488 = vmatprep.subr.bf16.mxu0 0
  %489 = vmatpush1.bf16.msra.mxu0 %v366
  %490 = vmatprep.subr.bf16.mxu0 0
  %491 = vmatpush1.bf16.msra.mxu0 %v365
  %492 = vmatprep.subr.bf16.mxu0 0
  %493 = vmatpush1.bf16.msra.mxu0 %v364
  %494 = vmatprep.subr.bf16.mxu0 0
  %495 = vmatpush1.bf16.msra.mxu0 %v363
  %496 = vmatprep.subr.bf16.mxu0 0
  %497 = vmatpush1.bf16.msra.mxu0 %v362
  %498 = vmatprep.subr.bf16.mxu0 0
  %499 = vmatpush2.bf16.msra.mxu0 %v377
  %500 = vmatprep.subr.bf16.mxu0 0
  %501 = vmatpush2.bf16.msra.mxu0 %v376
  %502 = vmatprep.subr.bf16.mxu0 0
  %503 = vmatpush2.bf16.msra.mxu0 %v375
  %504 = vmatprep.subr.bf16.mxu0 0
  %505 = vmatpush2.bf16.msra.mxu0 %v374
  %506 = vmatprep.subr.bf16.mxu0 0
  %507 = vmatpush2.bf16.msra.mxu0 %v373
  %508 = vmatprep.subr.bf16.mxu0 0
  %509 = vmatpush2.bf16.msra.mxu0 %v372
  %510 = vmatprep.subr.bf16.mxu0 0
  %511 = vmatpush2.bf16.msra.mxu0 %v371
  %512 = vmatprep.subr.bf16.mxu0 0
  %513 = vmatpush2.bf16.msra.mxu0 %v370
  %514 = vmatprep.mubr.bf16.mxu0 %v145
  %515 = vmatmul.mubr.bf16.gmra.mxu0 %v144
  %v516 = vpop.f32.mrf.mxu0
  %v517 = vadd.f32 %v477, %v516
  %v518 = vpop.f32.mrf.mxu0
  %v519 = vpop.f32.mrf.mxu0
  %v520 = vpop.f32.mrf.mxu0
  %521 = vdwg.mxu0
  %522 = vmatprep.subr.bf16.mxu0 0
  %523 = vmatpush1.bf16.msra.mxu0 %v385
  %524 = vmatprep.subr.bf16.mxu0 0
  %525 = vmatpush1.bf16.msra.mxu0 %v384
  %526 = vmatprep.subr.bf16.mxu0 0
  %527 = vmatpush1.bf16.msra.mxu0 %v383
  %528 = vmatprep.subr.bf16.mxu0 0
  %529 = vmatpush1.bf16.msra.mxu0 %v382
  %530 = vmatprep.subr.bf16.mxu0 0
  %531 = vmatpush1.bf16.msra.mxu0 %v381
  %532 = vmatprep.subr.bf16.mxu0 0
  %533 = vmatpush1.bf16.msra.mxu0 %v380
  %534 = vmatprep.subr.bf16.mxu0 0
  %535 = vmatpush1.bf16.msra.mxu0 %v379
  %536 = vmatprep.subr.bf16.mxu0 0
  %537 = vmatpush1.bf16.msra.mxu0 %v378
  %538 = vmatprep.subr.bf16.mxu0 0
  %539 = vmatpush2.bf16.msra.mxu0 %v393
  %540 = vmatprep.subr.bf16.mxu0 0
  %541 = vmatpush2.bf16.msra.mxu0 %v392
  %542 = vmatprep.subr.bf16.mxu0 0
  %543 = vmatpush2.bf16.msra.mxu0 %v391
  %544 = vmatprep.subr.bf16.mxu0 0
  %545 = vmatpush2.bf16.msra.mxu0 %v390
  %546 = vmatprep.subr.bf16.mxu0 0
  %547 = vmatpush2.bf16.msra.mxu0 %v389
  %548 = vmatprep.subr.bf16.mxu0 0
  %549 = vmatpush2.bf16.msra.mxu0 %v388
  %550 = vmatprep.subr.bf16.mxu0 0
  %551 = vmatpush2.bf16.msra.mxu0 %v387
  %552 = vmatprep.subr.bf16.mxu0 0
  %553 = vmatpush2.bf16.msra.mxu0 %v386
  %554 = vmatprep.mubr.bf16.mxu0 %v147
  %555 = vmatmul.mubr.bf16.gmra.mxu0 %v146
  %v556 = vpop.f32.mrf.mxu0
  %v557 = vadd.f32 %v517, %v556
  %v558 = vpop.f32.mrf.mxu0
  %v559 = vpop.f32.mrf.mxu0
  %v560 = vpop.f32.mrf.mxu0
  %561 = vdwg.mxu0
  %v562 = vmax.f32 %v557, 0.0
  %v563 = vld [vmem:[%s3] sm:$0xff]
  %v564 = vld [vmem:[%s3 + $0x8] sm:$0xff]
  %v565 = vld [vmem:[%s3 + $0x10] sm:$0xff]
  %v566 = vld [vmem:[%s3 + $0x18] sm:$0xff]
  %v567 = vld [vmem:[%s3 + $0x20] sm:$0xff]
  %v568 = vld [vmem:[%s3 + $0x28] sm:$0xff]
  %v569 = vld [vmem:[%s3 + $0x30] sm:$0xff]
  %v570 = vld [vmem:[%s3 + $0x38] sm:$0xff]
  %v571 = vld [vmem:[%s4] sm:$0x1]
  %v573 = vlaneseq
  %v574 = vshrl.u32 %v573, 7
  %v575 = vsub.s32 0, %v574
  %v576 = vrot.slane %v571, %v575
  %vm578 = vcmask 523264
  %v580 = vsel %vm578, %v562, 0
  %582 = vmatprep.subr.mxu0 0.0
  %583 = vmatpush1.msra.mxu0 0.0
  %584 = vmatprep.subr.mxu0 0.0
  %585 = vmatpush1.msra.mxu0 0.0
  %586 = vmatprep.subr.mxu0 0.0
  %587 = vmatpush1.msra.mxu0 0.0
  %588 = vmatprep.subr.mxu0 0.0
  %589 = vmatpush1.msra.mxu0 0.0
  %590 = vmatprep.subr.mxu0 0.0
  %591 = vmatpush1.msra.mxu0 0.0
  %592 = vmatprep.subr.mxu0 0.0
  %593 = vmatpush1.msra.mxu0 0.0
  %594 = vmatprep.subr.mxu0 0.0
  %595 = vmatpush1.msra.mxu0 0.0
  %596 = vmatprep.subr.mxu0 0.0
  %597 = vmatpush1.msra.mxu0 0.0
  %598 = vmatprep.subr.mxu0 0.0
  %599 = vmatpush1.msra.mxu0 %v570
  %600 = vmatprep.subr.mxu0 0.0
  %601 = vmatpush1.msra.mxu0 %v569
  %602 = vmatprep.subr.mxu0 0.0
  %603 = vmatpush1.msra.mxu0 %v568
  %604 = vmatprep.subr.mxu0 0.0
  %605 = vmatpush1.msra.mxu0 %v567
  %606 = vmatprep.subr.mxu0 0.0
  %607 = vmatpush1.msra.mxu0 %v566
  %608 = vmatprep.subr.mxu0 0.0
  %609 = vmatpush1.msra.mxu0 %v565
  %610 = vmatprep.subr.mxu0 0.0
  %611 = vmatpush1.msra.mxu0 %v564
  %612 = vmatprep.subr.mxu0 0.0
  %613 = vmatpush1.msra.mxu0 %v563
  %614 = vmatprep.subr.mxu0 0.0
  %615 = vmatpush2.msra.mxu0 0.0
  %616 = vmatprep.subr.mxu0 0.0
  %617 = vmatpush2.msra.mxu0 0.0
  %618 = vmatprep.subr.mxu0 0.0
  %619 = vmatpush2.msra.mxu0 0.0
  %620 = vmatprep.subr.mxu0 0.0
  %621 = vmatpush2.msra.mxu0 0.0
  %622 = vmatprep.subr.mxu0 0.0
  %623 = vmatpush2.msra.mxu0 0.0
  %624 = vmatprep.subr.mxu0 0.0
  %625 = vmatpush2.msra.mxu0 0.0
  %626 = vmatprep.subr.mxu0 0.0
  %627 = vmatpush2.msra.mxu0 0.0
  %628 = vmatprep.subr.mxu0 0.0
  %629 = vmatpush2.msra.mxu0 0.0
  %630 = vmatprep.subr.mxu0 0.0
  %631 = vmatpush2.msra.mxu0 0.0
  %632 = vmatprep.subr.mxu0 0.0
  %633 = vmatpush2.msra.mxu0 0.0
  %634 = vmatprep.subr.mxu0 0.0
  %635 = vmatpush2.msra.mxu0 0.0
  %636 = vmatprep.subr.mxu0 0.0
  %637 = vmatpush2.msra.mxu0 0.0
  %638 = vmatprep.subr.mxu0 0.0
  %639 = vmatpush2.msra.mxu0 0.0
  %640 = vmatprep.subr.mxu0 0.0
  %641 = vmatpush2.msra.mxu0 0.0
  %642 = vmatprep.subr.mxu0 0.0
  %643 = vmatpush2.msra.mxu0 0.0
  %644 = vmatprep.subr.mxu0 0.0
  %645 = vmatpush2.msra.mxu0 0.0
  %646 = vmatprep.mubr.f32.mxu0 0.0
  %647 = vmatmul.mubr.f32.gmra.mxu0 %v580
  %v648 = vpop.f32.mrf.mxu0
  %v649 = vadd.f32 %v576, %v648
  %v650 = vpop.f32.mrf.mxu0
  %651 = vdwg.mxu0
  %v652 = vmax.f32 %v649, 0.0
  %v653 = vld [vmem:[%s5] sm:$0xff]
  %v654 = vld [vmem:[%s5 + $0x8] sm:$0xff]
  %v655 = vld [vmem:[%s5 + $0x10] sm:$0xff]
  %v656 = vld [vmem:[%s5 + $0x18] sm:$0xff]
  %v657 = vld [vmem:[%s6] sm:$0x1]
  %v659 = vlaneseq
  %v660 = vshrl.u32 %v659, 7
  %v661 = vsub.s32 0, %v660
  %v662 = vrot.slane %v657, %v661
  %vm664 = vcmask 261120
  %v666 = vsel %vm664, %v652, 0
  %668 = vmatprep.subr.mxu0 0.0
  %669 = vmatpush1.msra.mxu0 0.0
  %670 = vmatprep.subr.mxu0 0.0
  %671 = vmatpush1.msra.mxu0 0.0
  %672 = vmatprep.subr.mxu0 0.0
  %673 = vmatpush1.msra.mxu0 0.0
  %674 = vmatprep.subr.mxu0 0.0
  %675 = vmatpush1.msra.mxu0 0.0
  %676 = vmatprep.subr.mxu0 0.0
  %677 = vmatpush1.msra.mxu0 0.0
  %678 = vmatprep.subr.mxu0 0.0
  %679 = vmatpush1.msra.mxu0 0.0
  %680 = vmatprep.subr.mxu0 0.0
  %681 = vmatpush1.msra.mxu0 0.0
  %682 = vmatprep.subr.mxu0 0.0
  %683 = vmatpush1.msra.mxu0 0.0
  %684 = vmatprep.subr.mxu0 0.0
  %685 = vmatpush1.msra.mxu0 0.0
  %686 = vmatprep.subr.mxu0 0.0
  %687 = vmatpush1.msra.mxu0 0.0
  %688 = vmatprep.subr.mxu0 0.0
  %689 = vmatpush1.msra.mxu0 0.0
  %690 = vmatprep.subr.mxu0 0.0
  %691 = vmatpush1.msra.mxu0 0.0
  %692 = vmatprep.subr.mxu0 0.0
  %693 = vmatpush1.msra.mxu0 %v656
  %694 = vmatprep.subr.mxu0 0.0
  %695 = vmatpush1.msra.mxu0 %v655
  %696 = vmatprep.subr.mxu0 0.0
  %697 = vmatpush1.msra.mxu0 %v654
  %698 = vmatprep.subr.mxu0 0.0
  %699 = vmatpush1.msra.mxu0 %v653
  %700 = vmatprep.subr.mxu0 0.0
  %701 = vmatpush2.msra.mxu0 0.0
  %702 = vmatprep.subr.mxu0 0.0
  %703 = vmatpush2.msra.mxu0 0.0
  %704 = vmatprep.subr.mxu0 0.0
  %705 = vmatpush2.msra.mxu0 0.0
  %706 = vmatprep.subr.mxu0 0.0
  %707 = vmatpush2.msra.mxu0 0.0
  %708 = vmatprep.subr.mxu0 0.0
  %709 = vmatpush2.msra.mxu0 0.0
  %710 = vmatprep.subr.mxu0 0.0
  %711 = vmatpush2.msra.mxu0 0.0
  %712 = vmatprep.subr.mxu0 0.0
  %713 = vmatpush2.msra.mxu0 0.0
  %714 = vmatprep.subr.mxu0 0.0
  %715 = vmatpush2.msra.mxu0 0.0
  %716 = vmatprep.subr.mxu0 0.0
  %717 = vmatpush2.msra.mxu0 0.0
  %718 = vmatprep.subr.mxu0 0.0
  %719 = vmatpush2.msra.mxu0 0.0
  %720 = vmatprep.subr.mxu0 0.0
  %721 = vmatpush2.msra.mxu0 0.0
  %722 = vmatprep.subr.mxu0 0.0
  %723 = vmatpush2.msra.mxu0 0.0
  %724 = vmatprep.subr.mxu0 0.0
  %725 = vmatpush2.msra.mxu0 0.0
  %726 = vmatprep.subr.mxu0 0.0
  %727 = vmatpush2.msra.mxu0 0.0
  %728 = vmatprep.subr.mxu0 0.0
  %729 = vmatpush2.msra.mxu0 0.0
  %730 = vmatprep.subr.mxu0 0.0
  %731 = vmatpush2.msra.mxu0 0.0
  %732 = vmatprep.mubr.f32.mxu0 0.0
  %733 = vmatmul.mubr.f32.gmra.mxu0 %v666
  %v734 = vpop.f32.mrf.mxu0
  %v735 = vadd.f32 %v662, %v734
  %v736 = vpop.f32.mrf.mxu0
  %737 = vdwg.mxu0
  %v738 = vmax.f32 %v735, 0.0
  %vm739 = vcmask 15360
  %740 = vst.msk [vmem:[%s7] sm:$0xff] %vm739, %v738
  // Predicated region
  $region30: #{tpu_custom_call.1} parent=0 // pred_check
    _
  $region31: #{tpu_custom_call.1} parent=0 // pred_check_branch
    %742 = sbr.rel (0) target = $region33
  $region32: #{tpu_custom_call.1} parent=0 // pred_region
    _
  $region33: #{tpu_custom_call.1} parent=0 // pred_fallthru
    _
  // Predicated region
  $region34: #{tpu_custom_call.1} parent=0 // pred_check
    _
  $region35: #{tpu_custom_call.1} parent=0 // pred_check_branch
    %744 = sbr.rel (0) target = $region37
  $region36: #{tpu_custom_call.1} parent=0 // pred_region
    _
  $region37: #{tpu_custom_call.1} parent=0 // pred_fallthru
    _

</llo_original>
